<compile_context>
chip_gen: v6e
topology: v6e:2x2x1
jax: 0.10.0
libtpu: 0.0.40
codegen_flags: <defaults>
</compile_context>

<pallas_src>
import functools

import jax
import jax.numpy as jnp
from jax.experimental import pallas as pl
from jax.experimental.pallas import tpu as pltpu

BN_EPS = 1e-5


def _round_up(x, m):
    return ((x + m - 1) // m) * m


# ---------------------------------------------------------------------------
# Pallas kernel: fused 1x1 conv (BN scale pre-folded into W) + bias + SiLU.
# ---------------------------------------------------------------------------

def focus_kernel(x_ref, w_ref, b_ref, o_ref):
    """x_ref: (1, 4*Cin, TM) bf16   space-to-depth pixels, lane-dense
       w_ref: (Cout, 4*Cin)  bf16   conv weight with folded BN scale (MXU LHS)
       b_ref: (Cout, 1)      f32    folded BN bias
       o_ref: (1, Cout, TM)  f32    NCHW output with flattened HW (lane-dense)
    """
    acc = jnp.dot(w_ref[...], x_ref[0], preferred_element_type=jnp.float32)
    y = acc + b_ref[...]                 # folded-BN bias (f32 epilogue)
    y = y * jax.nn.sigmoid(y)            # SiLU
    o_ref[0] = y.astype(o_ref.dtype)


# ---------------------------------------------------------------------------
# Tile sizing helpers
# ---------------------------------------------------------------------------

def _divisors(n):
    out, i = set(), 1
    while i * i <= n:
        if n % i == 0:
            out.add(i)
            out.add(n // i)
        i += 1
    return sorted(out)


def _pick_pixel_tile(p, n_batch, budget_px):
    """Largest divisor of p that is a legal lane-dense block (multiple of 128
    or the full axis), fits the VMEM pixel budget, and leaves >=2 total grid
    steps (megacore) whenever possible."""
    cands = [d for d in _divisors(p) if d % 128 == 0 or d == p]
    ok = [d for d in cands if d <= budget_px]
    if n_batch < 2:
        two_step = [d for d in ok if p // d >= 2]
        if two_step:
            ok = two_step
    if ok:
        return max(ok)
    return min(cands)   # smallest legal block; may exceed the soft budget


# ---------------------------------------------------------------------------
# Wrapper
# ---------------------------------------------------------------------------

def focus_forward(x_nchw, params):
    n, cin, h, w = x_nchw.shape
    hout, wout = h // 2, w // 2
    c4 = 4 * cin
    p = hout * wout

    w_fold = params["w_fold"]                      # (Cout, 4*Cin) bf16
    cout = w_fold.shape[0]
    bias = params["bias"].reshape(cout, 1).astype(jnp.float32)

    # Space-to-depth in the exact torch concat order (TL, BL, TR, BR); XLA
    # fuses the strided slices + concat + bf16 cast into one HBM pass; the
    # flatten to (N, 4*Cin, Hout*Wout) is a free row-major collapse.
    xc = jnp.concatenate(
        [x_nchw[:, :, 0::2, 0::2], x_nchw[:, :, 1::2, 0::2],
         x_nchw[:, :, 0::2, 1::2], x_nchw[:, :, 1::2, 1::2]],
        axis=1).astype(jnp.bfloat16).reshape(n, c4, p)
    # TODO(synk): consuming raw NCHW inside the kernel (4 taps via lane-strided
    # loads, W as MXU LHS) would remove this one input pass; skipped because
    # lane-strided in-kernel loads are not a guaranteed Mosaic lowering path.

    # --- VMEM-budgeted tile sizing (honest, padded estimate) ----------------
    vmem_cap = 64 * (1 << 20)                      # conservative default (v7x)
    try:
        vmem_cap = int(pltpu.get_tpu_info().vmem_capacity_bytes)
    except Exception:
        pass
    c4_pad = _round_up(c4, 16)                     # bf16 sublane packing
    cout_p8 = _round_up(cout, 8)
    # bytes per tile pixel: 2x-buffered bf16 input + 2x-buffered f32 output
    # + one f32 accumulator/epilogue temporary.
    per_px = 2 * c4_pad * 2 + 2 * cout_p8 * 4 + cout_p8 * 4
    budget_bytes = min(int(0.40 * vmem_cap), 48 * (1 << 20))
    tm = _pick_pixel_tile(p, n, max(128, budget_bytes // per_px))
    grid = (n, p // tm)

    tm_pad = _round_up(tm, 128)
    footprint = (per_px * tm_pad
                 + 2 * _round_up(cout, 16) * _round_up(c4, 128) * 2   # weight
                 + 2 * cout_p8 * 128 * 4)                             # bias
    vmem_limit = int(min(int(0.75 * vmem_cap),
                         max(16 * (1 << 20), footprint + (2 << 20))))

    m_total = n * p
    cost = pl.CostEstimate(
        flops=2 * m_total * c4 * cout,
        transcendentals=m_total * cout,
        bytes_accessed=int(xc.size * 2 + w_fold.size * 2 + m_total * cout * 4),
    )

    out = pl.pallas_call(
        focus_kernel,
        out_shape=jax.ShapeDtypeStruct((n, cout, p), x_nchw.dtype),
        grid_spec=pltpu.PrefetchScalarGridSpec(
            num_scalar_prefetch=0,
            grid=grid,
            in_specs=[
                pl.BlockSpec((1, c4, tm), lambda b, i: (b, 0, i)),
                pl.BlockSpec((cout, c4), lambda b, i: (0, 0)),
                pl.BlockSpec((cout, 1), lambda b, i: (0, 0)),
            ],
            out_specs=pl.BlockSpec((1, cout, tm), lambda b, i: (b, 0, i)),
        ),
        compiler_params=pltpu.CompilerParams(
            dimension_semantics=("parallel", "parallel"),
            vmem_limit_bytes=vmem_limit,
        ),
        cost_estimate=cost,
    )(xc, w_fold, bias)

    # Free row-major split of the flattened HW axis -> NCHW output.
    return out.reshape(n, cout, hout, wout)


# ---------------------------------------------------------------------------
# Parameter construction (deterministic, synthetic; BN folded for inference)
# ---------------------------------------------------------------------------

def _fold_bn(gamma, beta, mean, var):
    scale = gamma / jnp.sqrt(var + BN_EPS)
    bias = beta - mean * scale
    return scale, bias


def init_focus(key, in_channels, out_channels):
    kw, kg, kb, km, kv = jax.random.split(key, 5)
    c4 = 4 * in_channels
    # 1x1 conv weight in the PyTorch concat channel order (TL, BL, TR, BR).
    w_concat = 0.2 * jax.random.normal(kw, (c4, out_channels), jnp.float32)
    gamma = 1.0 + 0.1 * jax.random.normal(kg, (out_channels,), jnp.float32)
    beta = 0.1 * jax.random.normal(kb, (out_channels,), jnp.float32)
    mean = 0.1 * jax.random.normal(km, (out_channels,), jnp.float32)
    var = jax.random.uniform(kv, (out_channels,), jnp.float32, 0.5, 1.5)
    scale, bias = _fold_bn(gamma, beta, mean, var)

    # Fold the BN scale into the conv weight (in f32), pre-transpose to the
    # (Cout, 4*Cin) MXU-LHS layout used by the kernel, cast to bf16 once.
    w_fold = (scale[:, None] * w_concat.T).astype(jnp.bfloat16)

    return {"w_concat": w_concat, "w_fold": w_fold, "scale": scale, "bias": bias}


# ---------------------------------------------------------------------------
# Pure-JAX reference (matches the PyTorch Focus forward exactly)
# ---------------------------------------------------------------------------

def focus_reference(x_nchw, params):
    tl = x_nchw[..., ::2, ::2]
    tr = x_nchw[..., ::2, 1::2]
    bl = x_nchw[..., 1::2, ::2]
    br = x_nchw[..., 1::2, 1::2]
    xc = jnp.concatenate([tl, bl, tr, br], axis=1)          # (N, 4C, Hout, Wout)
    y = jnp.einsum("nchw,cd->ndhw", xc, params["w_concat"])
    y = y * params["scale"][None, :, None, None] + params["bias"][None, :, None, None]
    return y * jax.nn.sigmoid(y)


# ---------------------------------------------------------------------------
# Main
# ---------------------------------------------------------------------------

if __name__ == "__main__":
    key = jax.random.PRNGKey(0)
    kx, kp = jax.random.split(key)

    N, Cin, H, W = 2, 4, 16, 16          # PyTorch-style NCHW input
    Cout = 8                             # Focus(in_channels=4, out_channels=8)
    x = jax.random.normal(kx, (N, Cin, H, W), jnp.float32)
    params = init_focus(kp, Cin, Cout)

    fwd = jax.jit(functools.partial(focus_forward, params=params))
    out = jax.block_until_ready(fwd(x))

    ref = focus_reference(x, params)
    assert out.shape == (N, Cout, H // 2, W // 2), out.shape
    # bf16 MXU operands (with BN scale folded into the bf16 weight) -> slightly
    # loose tolerance vs the f32 reference.
    assert jnp.allclose(out, ref, rtol=2e-2, atol=2e-2), float(
        jnp.max(jnp.abs(out - ref)))

    print("KERNEL_OK")
</pallas_src>

<mosaic_0001>
module attributes {stable_mosaic.version = 11 : i64} {
  func.func @focus_kernel(%arg0: i32, %arg1: i32, %arg2: memref<1x16x64xbf16, #tpu.memory_space<vmem>>, %arg3: memref<8x16xbf16, #tpu.memory_space<vmem>>, %arg4: memref<8x1xf32, #tpu.memory_space<vmem>>, %arg5: memref<1x8x64xf32, #tpu.memory_space<vmem>>) attributes {dimension_semantics = [#tpu.dimension_semantics<parallel>, #tpu.dimension_semantics<parallel>], iteration_bounds = array<i64: 2, 1>, scalar_prefetch = 0 : i64, scratch_operands = 0 : i64, tpu.core_type = #tpu.core_type<tc>, window_params = [{transform_indices = @transform_0, window_bounds = array<i64: 1, 16, 64>}, {pipeline_mode = #tpu.pipeline_mode<synchronous>, transform_indices = @transform_1, window_bounds = array<i64: 8, 16>}, {pipeline_mode = #tpu.pipeline_mode<synchronous>, transform_indices = @transform_2, window_bounds = array<i64: 8, 1>}, {transform_indices = @transform_3, window_bounds = array<i64: 1, 8, 64>}]} {
    %c0 = arith.constant 0 : index
    %c0_0 = arith.constant 0 : index
    %0 = vector.load %arg3[%c0, %c0_0] : memref<8x16xbf16, #tpu.memory_space<vmem>>, vector<8x16xbf16>
    %c0_1 = arith.constant 0 : index
    %c0_2 = arith.constant 0 : index
    %c0_3 = arith.constant 0 : index
    %1 = vector.load %arg2[%c0_1, %c0_2, %c0_3] : memref<1x16x64xbf16, #tpu.memory_space<vmem>>, vector<1x16x64xbf16>
    %2 = vector.shape_cast %1 : vector<1x16x64xbf16> to vector<16x64xbf16>
    %cst = arith.constant dense<0.000000e+00> : vector<8x64xf32>
    %3 = tpu.matmul %0, %2, %cst {dimension_numbers = #tpu.dot_dimension_numbers<[1], [0], [0], [1], [0, 0, 1, 1], [], []>} : vector<8x16xbf16>, vector<16x64xbf16>, vector<8x64xf32> -> vector<8x64xf32>
    %c0_4 = arith.constant 0 : index
    %c0_5 = arith.constant 0 : index
    %4 = vector.load %arg4[%c0_4, %c0_5] : memref<8x1xf32, #tpu.memory_space<vmem>>, vector<8x1xf32>
    %5 = vector.broadcast %4 : vector<8x1xf32> to vector<8x64xf32>
    %6 = arith.addf %3, %5 : vector<8x64xf32>
    %7 = arith.negf %6 : vector<8x64xf32>
    %8 = math.exp %7 : vector<8x64xf32>
    %cst_6 = arith.constant 1.000000e+00 : f32
    %9 = vector.broadcast %cst_6 : f32 to vector<8x64xf32>
    %10 = arith.addf %9, %8 : vector<8x64xf32>
    %11 = arith.divf %9, %10 : vector<8x64xf32>
    %12 = arith.mulf %6, %11 : vector<8x64xf32>
    %c0_7 = arith.constant 0 : index
    %c0_8 = arith.constant 0 : index
    %c0_9 = arith.constant 0 : index
    %13 = vector.load %arg5[%c0_7, %c0_8, %c0_9] : memref<1x8x64xf32, #tpu.memory_space<vmem>>, vector<1x8x64xf32>
    %14 = vector.shape_cast %13 : vector<1x8x64xf32> to vector<8x64xf32>
    %15 = vector.shape_cast %12 : vector<8x64xf32> to vector<1x8x64xf32>
    tpu.vector_store %arg5[%c0_7, %c0_8, %c0_9], %15 {strides = array<i32>} : memref<1x8x64xf32, #tpu.memory_space<vmem>>, vector<1x8x64xf32>,
    return
  }
  func.func @transform_0(%arg0: i32, %arg1: i32) -> (i32, i32, i32) {
    %c0_i32 = arith.constant 0 : i32
    %c0_i32_0 = arith.constant 0 : i32
    return %arg0, %c0_i32, %arg1 : i32, i32, i32
  }
  func.func @transform_1(%arg0: i32, %arg1: i32) -> (i32, i32) {
    %c0_i32 = arith.constant 0 : i32
    %c0_i32_0 = arith.constant 0 : i32
    %c0_i32_1 = arith.constant 0 : i32
    return %c0_i32, %c0_i32_0 : i32, i32
  }
  func.func @transform_2(%arg0: i32, %arg1: i32) -> (i32, i32) {
    %c0_i32 = arith.constant 0 : i32
    %c0_i32_0 = arith.constant 0 : i32
    %c0_i32_1 = arith.constant 0 : i32
    return %c0_i32, %c0_i32_0 : i32, i32
  }
  func.func @transform_3(%arg0: i32, %arg1: i32) -> (i32, i32, i32) {
    %c0_i32 = arith.constant 0 : i32
    %c0_i32_0 = arith.constant 0 : i32
    return %arg0, %c0_i32, %arg1 : i32, i32, i32
  }
}

</mosaic_0001>

<llo_original>
// kernel: focus_forward.1
$region0: #{focus_forward.1}
  #allocation0 [shape = 'u32[]', space=smem, size = 0x4, offset = 0x4, fixed_abs, tag = 'smem constant byte address 0x4 - core index']
  #allocation1 [shape = 'u32[144,128]{1,0:T(1,128)}', space=vmem, size = 0x12000, scoped, tag = 'internal scratch']
  %s0 = inlined_call_operand.vmem [shape: bf16[2,16,64], index: 0, kind: input, shape index: {}]
  %s1 = inlined_call_operand.vmem [shape: bf16[8,16], index: 1, kind: input, shape index: {}]
  %s2 = inlined_call_operand.vmem [shape: f32[8,1], index: 2, kind: input, shape index: {}]
  %s3 = inlined_call_operand.vmem [shape: f32[2,8,64], index: 3, kind: output, shape index: {}]
  %s4 = sld [smem:[#allocation0]]
  $region45: #{focus_forward.1} parent=0
    _
  %s6 = ssub.s32 1, %s4
  %s7 = scalar_select 0, %s6, %s4
  loop: start=0, step=1, limit=4
  $region2: #{focus_forward.1} parent=0 // loop_pre_header
    _
  $region3: #{focus_forward.1} parent=0 // loop_header
    %s9 = sphi 0, %s13
    %p10 = scmp.ge.s32.totalorder %s9, 4
    %s16 = sphi 0, %s28
    %s17 = sphi 0, %s24
    %s18 = sphi 0, %s16
    %s19 = sphi 0, %s17
    %s20 = sphi 0, %s18
    %s21 = sphi 0, %s19
    %s33 = sphi 0, %s35
    %s36 = sphi 0, %s33
    %s37 = sphi 0, %s36
    %s53 = sphi 0, %s37
    %s57 = sphi 0, %s57
    %s59 = sphi 0, %s57
    %s60 = sphi 0, %s59
    %s74 = sphi 0, %s60
    %s78 = sphi 0, %s78
    %s80 = sphi 0, %s78
    %s81 = sphi 0, %s80
    %s95 = sphi 0, %s81
    %s103 = sphi 0, %s105
    %s106 = sphi 0, %s103
    %s107 = sphi 0, %s106
    %s123 = sphi 0, %s107
  $region4: #{focus_forward.1} parent=0 // loop_header_branch
    %12 = sbr.rel (%p10) target = $region8
  $region5: #{focus_forward.1} parent=0 // loop_body
    %s14 = ssub.s32 %s9, 1
    %s15 = ssub.s32 %s9, 2
    %s22 = sadd.s32 1, %s17
    %p23 = scmp.ge.s32.totalorder %s22, 1
    %s24 = scalar_select %p23, 0, %s22
    %s25 = sadd.s32 1, %s16
    %s26 = scalar_select %p23, %s25, %s16
    %p27 = scmp.ge.s32.totalorder %s26, 2
    %s28 = scalar_select %p27, 0, %s26
    %s29 = ssub.s32 %s16, %s28
    %s30 = ssub.s32 %s17, %s24
    %s31 = sor.u32 %s29, %s30
    %p32 = scmp.eq.s32.totalorder %s31, 0
    %s34 = sadd.s32 %s33, 1
    %s35 = scalar_select %p32, %s33, %s34
    %p38 = pneg %p32
    %p39 = scmp.eq.s32.totalorder %s9, 1
    %p40 = por %p38, %p39
    %p41 = scmp.ne.s32.totalorder %s33, %s36
    %p42 = scmp.eq.s32.totalorder %s9, 0
    %p43 = por %p41, %p42
    %p44 = scmp.ne.s32.totalorder %s33, %s36
    %p45 = scmp.eq.s32.totalorder %s14, 1
    %p46 = por %p44, %p45
    %p47 = scmp.ne.s32.totalorder %s36, %s37
    %p48 = scmp.eq.s32.totalorder %s14, 0
    %p49 = por %p47, %p48
    %p50 = scmp.ne.s32.totalorder %s36, %s37
    %p51 = scmp.eq.s32.totalorder %s15, 1
    %p52 = por %p50, %p51
    %p54 = scmp.ne.s32.totalorder %s37, %s53
    %p55 = scmp.eq.s32.totalorder %s15, 0
    %p56 = por %p54, %p55
    %s58 = sadd.s32 %s57, 1
    %p61 = scmp.eq.s32.totalorder %s9, 1
    %p62 = scmp.ne.s32.totalorder %s57, %s59
    %p63 = scmp.eq.s32.totalorder %s9, 0
    %p64 = por %p62, %p63
    %p65 = scmp.ne.s32.totalorder %s57, %s59
    %p66 = scmp.eq.s32.totalorder %s14, 1
    %p67 = por %p65, %p66
    %p68 = scmp.ne.s32.totalorder %s59, %s60
    %p69 = scmp.eq.s32.totalorder %s14, 0
    %p70 = por %p68, %p69
    %p71 = scmp.ne.s32.totalorder %s59, %s60
    %p72 = scmp.eq.s32.totalorder %s15, 1
    %p73 = por %p71, %p72
    %p75 = scmp.ne.s32.totalorder %s60, %s74
    %p76 = scmp.eq.s32.totalorder %s15, 0
    %p77 = por %p75, %p76
    %s79 = sadd.s32 %s78, 1
    %p82 = scmp.eq.s32.totalorder %s9, 1
    %p83 = scmp.ne.s32.totalorder %s78, %s80
    %p84 = scmp.eq.s32.totalorder %s9, 0
    %p85 = por %p83, %p84
    %p86 = scmp.ne.s32.totalorder %s78, %s80
    %p87 = scmp.eq.s32.totalorder %s14, 1
    %p88 = por %p86, %p87
    %p89 = scmp.ne.s32.totalorder %s80, %s81
    %p90 = scmp.eq.s32.totalorder %s14, 0
    %p91 = por %p89, %p90
    %p92 = scmp.ne.s32.totalorder %s80, %s81
    %p93 = scmp.eq.s32.totalorder %s15, 1
    %p94 = por %p92, %p93
    %p96 = scmp.ne.s32.totalorder %s81, %s95
    %p97 = scmp.eq.s32.totalorder %s15, 0
    %p98 = por %p96, %p97
    %s99 = ssub.s32 %s16, %s28
    %s100 = ssub.s32 %s17, %s24
    %s101 = sor.u32 %s99, %s100
    %p102 = scmp.eq.s32.totalorder %s101, 0
    %s104 = sadd.s32 %s103, 1
    %s105 = scalar_select %p102, %s103, %s104
    %p108 = pneg %p102
    %p109 = scmp.eq.s32.totalorder %s9, 1
    %p110 = por %p108, %p109
    %p111 = scmp.ne.s32.totalorder %s103, %s106
    %p112 = scmp.eq.s32.totalorder %s9, 0
    %p113 = por %p111, %p112
    %p114 = scmp.ne.s32.totalorder %s103, %s106
    %p115 = scmp.eq.s32.totalorder %s14, 1
    %p116 = por %p114, %p115
    %p117 = scmp.ne.s32.totalorder %s106, %s107
    %p118 = scmp.eq.s32.totalorder %s14, 0
    %p119 = por %p117, %p118
    %p120 = scmp.ne.s32.totalorder %s106, %s107
    %p121 = scmp.eq.s32.totalorder %s15, 1
    %p122 = por %p120, %p121
    %p124 = scmp.ne.s32.totalorder %s107, %s123
    %p125 = scmp.eq.s32.totalorder %s15, 0
    %p126 = por %p124, %p125
    %p127 = scmp.le.s32.totalorder 1, %s9
    %p128 = scmp.lt.s32.totalorder %s9, 3
    %p129 = pnand %p127, %p128
    %p130 = pneg %p129
    // Predicated region
    $region9: #{focus_forward.1} parent=5 // pred_check
      _
    $region10: #{focus_forward.1} parent=5 // pred_check_branch
      %132 = sbr.rel (%p129) target = $region12
    $region11: #{focus_forward.1} parent=5 // pred_region
      %s133 = ssub.s32 %s9, 1
      // Predicated region
      $region13: #{focus_forward.1} parent=11 // pred_check
        %p134 = pneg %p70
      $region14: #{focus_forward.1} parent=11 // pred_check_branch
        %136 = sbr.rel (%p134) target = $region16
      $region15: #{focus_forward.1} parent=11 // pred_region
        _
      $region16: #{focus_forward.1} parent=11 // pred_fallthru
        _
      // Predicated region
      $region17: #{focus_forward.1} parent=11 // pred_check
        %p137 = pneg %p91
      $region18: #{focus_forward.1} parent=11 // pred_check_branch
        %139 = sbr.rel (%p137) target = $region20
      $region19: #{focus_forward.1} parent=11 // pred_region
        _
      $region20: #{focus_forward.1} parent=11 // pred_fallthru
        _
    $region12: #{focus_forward.1} parent=5 // pred_fallthru
      _
    %p140 = scmp.lt.s32.totalorder %s9, 2
    // Predicated region
    $region21: #{focus_forward.1} parent=5 // pred_check
      %p141 = pneg %p140
    $region22: #{focus_forward.1} parent=5 // pred_check_branch
      %143 = sbr.rel (%p141) target = $region24
    $region23: #{focus_forward.1} parent=5 // pred_region
      // Predicated region
      $region25: #{focus_forward.1} parent=23 // pred_check
        %p144 = pneg %p43
      $region26: #{focus_forward.1} parent=23 // pred_check_branch
        %146 = sbr.rel (%p144) target = $region28
      $region27: #{focus_forward.1} parent=23 // pred_region
        %p147 = scmp.lt.s32.totalorder %s16, 1
        %s148 = scalar_select %p147, %s16, 1
        %p149 = scmp.lt.s32.totalorder %s17, 0
        %s150 = scalar_select %p149, %s17, 0
        %s151 = smul.addr %s148, 2
        %s152 = sadd.s32 %s150, %s151
        %s153 = smul.addr %s152, 4
        %s154 = scalar_lea.vmem %s0, %s153
      $region28: #{focus_forward.1} parent=23 // pred_fallthru
        _
    $region24: #{focus_forward.1} parent=5 // pred_fallthru
      _
    %p155 = scmp.le.s32.totalorder 1, %s9
    %p156 = scmp.lt.s32.totalorder %s9, 3
    %p157 = pnand %p155, %p156
    %p158 = pneg %p157
    // Predicated region
    $region29: #{focus_forward.1} parent=5 // pred_check
      _
    $region30: #{focus_forward.1} parent=5 // pred_check_branch
      %160 = sbr.rel (%p157) target = $region32
    $region31: #{focus_forward.1} parent=5 // pred_region
      %s161 = ssub.s32 %s9, 1
      %p162 = scmp.lt.s32.totalorder %s18, 1
      %s163 = scalar_select %p162, %s18, 1
      %p164 = scmp.lt.s32.totalorder %s19, 0
      %s165 = scalar_select %p164, %s19, 0
      %s166 = smul.addr %s163, 2
      %s167 = sadd.s32 %s165, %s166
      %s168 = smul.addr %s167, 4
      %s169 = scalar_lea.vmem %s0, %s168
      %p170 = pneg %p49
      %p171 = pneg %p46
      %p172 = pneg %p70
      %p173 = pneg %p67
      %p174 = pneg %p91
      %p175 = pneg %p88
      %p176 = pneg %p119
      %p177 = pneg %p116
      %p178 = scmp.lt.s32.totalorder %s18, 1
      %s179 = scalar_select %p178, %s18, 1
      %p180 = scmp.lt.s32.totalorder %s19, 0
      %s181 = scalar_select %p180, %s19, 0
      %s182 = sadd.s32 %s181, %s179
      %s183 = smul.addr %s182, 8
      %s184 = scalar_lea.vmem %s3, %s183
      %p185 = scmp.lt.s32.totalorder %s18, 1
      %s186 = scalar_select %p185, %s18, 1
      %p187 = scmp.lt.s32.totalorder %s19, 0
      %s188 = scalar_select %p187, %s19, 0
      %s189 = smul.addr %s186, 2
      %s190 = sadd.s32 %s188, %s189
      %s191 = smul.addr %s190, 4
      %s192 = scalar_lea.vmem %s0, %s191
      %p193 = scmp.lt.s32.totalorder %s18, 1
      %s194 = scalar_select %p193, %s18, 1
      %p195 = scmp.lt.s32.totalorder %s19, 0
      %s196 = scalar_select %p195, %s19, 0
      %s197 = sadd.s32 %s196, %s194
      %s198 = smul.addr %s197, 8
      %s199 = scalar_lea.vmem %s3, %s198
      %v201 = vld [vmem:[%s1] sm:$0xf]
      %v202 = vld [vmem:[%s192] sm:$0xf]
      %v203 = vld [vmem:[%s192 + $0x4] sm:$0xf]
      %v204 = vld [vmem:[%s2] sm:$0xff]
      %206 = vset.pattern.permute.xlu0 0
      %207 = vperm.xlu0 %206, %v204
      %v208 = vpop.permute.xlu0 %207
      %v212 = vunpack.c.l.b16 %v202
      %v213 = vunpack.c.l.b16 %v203
      %v214 = vpack.c.b16 %v213, %v212
      %vm216 = vcmask 130048
      %v218 = vsel %vm216, %v201, 0
      %220 = vmatprep.subr.bf16.mxu0 0
      %221 = vmatpush1.bf16.msra.mxu0 0
      %222 = vmatprep.subr.bf16.mxu0 0
      %223 = vmatpush1.bf16.msra.mxu0 0
      %224 = vmatprep.subr.bf16.mxu0 0
      %225 = vmatpush1.bf16.msra.mxu0 0
      %226 = vmatprep.subr.bf16.mxu0 0
      %227 = vmatpush1.bf16.msra.mxu0 0
      %228 = vmatprep.subr.bf16.mxu0 0
      %229 = vmatpush1.bf16.msra.mxu0 0
      %230 = vmatprep.subr.bf16.mxu0 0
      %231 = vmatpush1.bf16.msra.mxu0 0
      %232 = vmatprep.subr.bf16.mxu0 0
      %233 = vmatpush1.bf16.msra.mxu0 0
      %234 = vmatprep.subr.bf16.mxu0 0
      %235 = vmatpush1.bf16.msra.mxu0 %v214
      %236 = vmatprep.subr.bf16.mxu0 0
      %237 = vmatpush2.bf16.msra.mxu0 0
      %238 = vmatprep.subr.bf16.mxu0 0
      %239 = vmatpush2.bf16.msra.mxu0 0
      %240 = vmatprep.subr.bf16.mxu0 0
      %241 = vmatpush2.bf16.msra.mxu0 0
      %242 = vmatprep.subr.bf16.mxu0 0
      %243 = vmatpush2.bf16.msra.mxu0 0
      %244 = vmatprep.subr.bf16.mxu0 0
      %245 = vmatpush2.bf16.msra.mxu0 0
      %246 = vmatprep.subr.bf16.mxu0 0
      %247 = vmatpush2.bf16.msra.mxu0 0
      %248 = vmatprep.subr.bf16.mxu0 0
      %249 = vmatpush2.bf16.msra.mxu0 0
      %250 = vmatprep.subr.bf16.mxu0 0
      %251 = vmatpush2.bf16.msra.mxu0 0
      %252 = vmatprep.mubr.bf16.mxu0 0
      %253 = vmatmul.mubr.bf16.gmra.mxu0 %v218
      %v254 = vpop.f32.mrf.mxu0
      %v255 = vadd.f32 %v208, %v254
      %v256 = vpop.f32.mrf.mxu0
      %v257 = vpop.f32.mrf.mxu0
      %v258 = vpop.f32.mrf.mxu0
      %259 = vdwg.mxu0
      %v260 = vxor.u32 %v255, 2147483648
      %v261 = vmul.f32 %v260, 1.442695
      %v262 = vpow.pop %v261
      %v263 = vadd.f32 %v262, 1.0
      %v264 = vrcp.pop %v263
      %v265 = vmul.f32 1.0, %v264
      %v266 = vmul.f32 %v255, %v265
      %vm267 = vcmask 523264
      %268 = vst.msk [vmem:[%s199] sm:$0xff] %vm267, %v266
      %p269 = scmp.lt.s32.totalorder %s18, 1
      %s270 = scalar_select %p269, %s18, 1
      %p271 = scmp.lt.s32.totalorder %s19, 0
      %s272 = scalar_select %p271, %s19, 0
      %s273 = sadd.s32 %s272, %s270
      %s274 = smul.addr %s273, 8
      %s275 = scalar_lea.vmem %s3, %s274
      // Predicated region
      $region33: #{focus_forward.1} parent=31 // pred_check
        %p276 = pneg %p116
      $region34: #{focus_forward.1} parent=31 // pred_check_branch
        %278 = sbr.rel (%p276) target = $region36
      $region35: #{focus_forward.1} parent=31 // pred_region
        _
      $region36: #{focus_forward.1} parent=31 // pred_fallthru
        _
    $region32: #{focus_forward.1} parent=5 // pred_fallthru
      _
    %p279 = scmp.le.s32.totalorder 2, %s9
    // Predicated region
    $region37: #{focus_forward.1} parent=5 // pred_check
      %p280 = pneg %p279
    $region38: #{focus_forward.1} parent=5 // pred_check_branch
      %282 = sbr.rel (%p280) target = $region40
    $region39: #{focus_forward.1} parent=5 // pred_region
      %s283 = ssub.s32 %s9, 2
      // Predicated region
      $region41: #{focus_forward.1} parent=39 // pred_check
        %p284 = pneg %p122
      $region42: #{focus_forward.1} parent=39 // pred_check_branch
        %286 = sbr.rel (%p284) target = $region44
      $region43: #{focus_forward.1} parent=39 // pred_region
        %p287 = scmp.lt.s32.totalorder %s20, 1
        %s288 = scalar_select %p287, %s20, 1
        %p289 = scmp.lt.s32.totalorder %s21, 0
        %s290 = scalar_select %p289, %s21, 0
        %s291 = sadd.s32 %s290, %s288
        %s292 = smul.addr %s291, 8
        %s293 = scalar_lea.vmem %s3, %s292
      $region44: #{focus_forward.1} parent=39 // pred_fallthru
        _
    $region40: #{focus_forward.1} parent=5 // pred_fallthru
      _
  $region6: #{focus_forward.1} parent=0 // loop_footer
    %s13 = sadd.s32 1, %s9
  $region7: #{focus_forward.1} parent=0 // loop_footer_branch
    %8 = sbr.rel target = $region3
  $region8: #{focus_forward.1} parent=0 // loop_exit
    _

</llo_original>
